<compile_context>
chip_gen: v6e
topology: v6e:2x2x1
jax: 0.10.0
libtpu: 0.0.40
codegen_flags: <defaults>
</compile_context>

<pallas_src>
import functools

import jax
import jax.numpy as jnp
from jax.experimental import pallas as pl
from jax.experimental.pallas import tpu as pltpu

_MAX_TILE_B = 512  # streaming kernels are near HBM roofline well before this


def _round_up(x, m):
    return ((x + m - 1) // m) * m


def _sublane(dtype):
    # Native sublane tile rows: 8 for 32-bit, 16 for bf16, 32 for int8/fp8.
    return max(8, 32 // jnp.dtype(dtype).itemsize)


def _vmem_defaults():
    """Returns (io+temp footprint budget, default vmem_limit, vmem_limit cap) in bytes."""
    kind = ""
    try:
        kind = jax.devices()[0].device_kind.lower()
    except Exception:  # pragma: no cover - defensive only
        pass
    if ("v5" in kind) or ("v6" in kind):
        # 128 MiB physical VMEM; scoped default (16/32 MiB) must be raised explicitly.
        return 24 * (1 << 20), 80 * (1 << 20), 96 * (1 << 20)
    # v7x (64 MiB physical VMEM per TensorCore) or unknown generation: conservative.
    return 12 * (1 << 20), 40 * (1 << 20), 56 * (1 << 20)


def _kl_loss_kernel(pred_ref, label_ref, out_ref, *, batch_size):
    """One (tile_b, C) tile: softmax(label)*(log_softmax(label)-log_softmax(pred))*B."""
    pred = pred_ref[...].astype(jnp.float32)
    lab = label_ref[...].astype(jnp.float32)

    # log_softmax(prediction, axis=-1) = z1 - lse1
    m1 = jnp.max(pred, axis=-1, keepdims=True)
    z1 = pred - m1
    lse1 = jnp.log(jnp.sum(jnp.exp(z1), axis=-1, keepdims=True))

    # softmax(label, axis=-1) pieces (numerically stable)
    m2 = jnp.max(lab, axis=-1, keepdims=True)
    z2 = lab - m2
    e2 = jnp.exp(z2)
    s2 = jnp.sum(e2, axis=-1, keepdims=True)

    # p2 * (log_p2 - log_p1) * B
    #   = e2 * ((z2 - z1) + (lse1 - log(s2))) * (B / s2)
    # Reuses z1/z2 instead of materializing log_p1/log_p2 -> two fewer live f32 tiles.
    # 1/s2 is folded into one exact per-row (tile_b, 1) scale.
    scale = jnp.float32(batch_size) / s2
    loss = e2 * ((z2 - z1) + (lse1 - jnp.log(s2))) * scale
    out_ref[...] = loss.astype(out_ref.dtype)


def kl_loss(prediction, label, *, tile_b=None, vmem_limit_bytes=None,
            max_tile_b=_MAX_TILE_B, min_grid_steps=2):
    """Pallas implementation of KLLoss.forward for (B, C) inputs.

    Returns the elementwise loss (reduction='none') of shape (B, C), scaled by B,
    in the promoted input dtype. Math is f32 inside the kernel.
    """
    assert prediction.shape == label.shape
    assert prediction.ndim == 2, "expected (batch, classes) inputs"
    B, C = prediction.shape

    out_dtype = jnp.promote_types(prediction.dtype, label.dtype)
    pred_item = jnp.dtype(prediction.dtype).itemsize
    lab_item = jnp.dtype(label.dtype).itemsize
    out_item = jnp.dtype(out_dtype).itemsize

    sublane = max(_sublane(prediction.dtype), _sublane(label.dtype), _sublane(out_dtype))

    footprint_budget, vmem_default, vmem_cap = _vmem_defaults()

    # Per-row VMEM footprint: double-buffered DMA blocks for 2 inputs + 1 output,
    # plus ~6 live f32 intermediates (upcasts + temps) per row inside the kernel.
    per_row = (2 * (pred_item + lab_item + out_item) + 6 * 4) * C

    auto_tile = tile_b is None
    if auto_tile:
        tile_b = footprint_budget // max(per_row, 1)
        tile_b = min(tile_b, max_tile_b)
    tile_b = max(sublane, (int(tile_b) // sublane) * sublane)
    # Don't over-shoot tiny batches (still a single partial block if B < sublane).
    tile_b = min(tile_b, _round_up(B, sublane))

    if auto_tile and B > sublane * (min_grid_steps - 1):
        # Keep at least `min_grid_steps` grid steps so both v7x TensorCores (and their
        # share of HBM bandwidth) are used under dimension_semantics=("parallel",).
        tile_b = min(tile_b, max(sublane, _round_up(pl.cdiv(B, min_grid_steps), sublane)))

    grid_b = pl.cdiv(B, tile_b)
    if auto_tile and grid_b > 1 and grid_b % 2 == 1:
        # Prefer an even step count so the two-TC split stays balanced.
        cand = max(sublane, _round_up(pl.cdiv(B, grid_b + 1), sublane))
        if pl.cdiv(B, cand) % 2 == 0:
            tile_b = cand
            grid_b = pl.cdiv(B, cand)

    # Self-consistent VMEM limit: raise it (up to a generation cap) if the chosen tile's
    # footprint exceeds the default scoped limit (e.g. vocab-scale C at the 1-tile floor).
    footprint = tile_b * per_row + (2 << 20)  # + headroom for compiler scratch
    if vmem_limit_bytes is None:
        vmem_limit_bytes = vmem_default
    if footprint > vmem_limit_bytes:
        vmem_limit_bytes = min(vmem_cap, _round_up(footprint, 1 << 20))
    # TODO(synk): for extreme C where even a single sublane-row tile exceeds the VMEM cap,
    # add a second grid axis over C with an online (running max/sum) softmax.

    kernel = functools.partial(_kl_loss_kernel, batch_size=B)

    cost = pl.CostEstimate(
        flops=10 * B * C,
        transcendentals=2 * B * C,
        bytes_accessed=(pred_item + lab_item + out_item) * B * C,
    )

    out = pl.pallas_call(
        kernel,
        out_shape=jax.ShapeDtypeStruct((B, C), out_dtype),
        grid_spec=pltpu.PrefetchScalarGridSpec(
            num_scalar_prefetch=0,
            grid=(grid_b,),
            in_specs=[
                pl.BlockSpec((tile_b, C), lambda i: (i, 0)),
                pl.BlockSpec((tile_b, C), lambda i: (i, 0)),
            ],
            out_specs=pl.BlockSpec((tile_b, C), lambda i: (i, 0)),
        ),
        compiler_params=pltpu.CompilerParams(
            dimension_semantics=("parallel",),       # megacore sharding on v7x
            vmem_limit_bytes=int(vmem_limit_bytes),  # explicit: mandatory on v5e (16 MiB scoped default)
        ),
        cost_estimate=cost,
    )(prediction, label)
    return out


def _kl_loss_ref(prediction, label):
    # Pure-JAX reference mirroring the PyTorch module.
    B = prediction.shape[0]
    log_p1 = jax.nn.log_softmax(prediction.astype(jnp.float32), axis=1)
    log_p2 = jax.nn.log_softmax(label.astype(jnp.float32), axis=1)
    p2 = jnp.exp(log_p2)
    return p2 * (log_p2 - log_p1) * B


if __name__ == "__main__":
    key = jax.random.PRNGKey(0)
    k1, k2, k3, k4, k5, k6 = jax.random.split(key, 6)

    # Case 1: small ragged shapes (partial batch block, C < 128 -> masked stores only,
    # no wrapper-side pad/slice passes).
    B1, C1 = 6, 10
    pred1 = jax.random.normal(k1, (B1, C1), dtype=jnp.float32)
    lab1 = jax.random.normal(k2, (B1, C1), dtype=jnp.float32)
    out1 = jax.block_until_ready(kl_loss(pred1, lab1))
    ref1 = _kl_loss_ref(pred1, lab1)
    assert out1.shape == (B1, C1)
    assert out1.dtype == pred1.dtype
    assert jnp.allclose(out1, ref1, atol=1e-5, rtol=1e-4)

    # Case 2: lane/sublane-aligned shapes (multi-step parallel grid, lane-dense stores).
    B2, C2 = 16, 128
    pred2 = jax.random.normal(k3, (B2, C2), dtype=jnp.float32)
    lab2 = jax.random.normal(k4, (B2, C2), dtype=jnp.float32)
    out2 = jax.block_until_ready(kl_loss(pred2, lab2))
    ref2 = _kl_loss_ref(pred2, lab2)
    assert out2.shape == (B2, C2)
    assert jnp.allclose(out2, ref2, atol=1e-5, rtol=1e-4)

    # Case 3: bf16 inputs (dtype-aware 16-row sublane rounding, f32 math in-kernel).
    B3, C3 = 20, 96
    pred3 = jax.random.normal(k5, (B3, C3), dtype=jnp.float32).astype(jnp.bfloat16)
    lab3 = jax.random.normal(k6, (B3, C3), dtype=jnp.float32).astype(jnp.bfloat16)
    out3 = jax.block_until_ready(kl_loss(pred3, lab3))
    ref3 = _kl_loss_ref(pred3, lab3)
    assert out3.shape == (B3, C3)
    assert out3.dtype == jnp.bfloat16
    assert jnp.allclose(out3.astype(jnp.float32), ref3, atol=3e-2, rtol=3e-2)

    print("KERNEL_OK")
</pallas_src>

<mosaic_0001>
module attributes {stable_mosaic.version = 11 : i64} {
  func.func @_kl_loss_kernel(%arg0: i32, %arg1: memref<8x10xf32, #tpu.memory_space<vmem>>, %arg2: memref<8x10xf32, #tpu.memory_space<vmem>>, %arg3: memref<8x10xf32, #tpu.memory_space<vmem>>) attributes {dimension_semantics = [#tpu.dimension_semantics<parallel>], iteration_bounds = array<i64: 1>, scalar_prefetch = 0 : i64, scratch_operands = 0 : i64, tpu.core_type = #tpu.core_type<tc>, window_params = [{transform_indices = @transform_0, window_bounds = array<i64: 8, 10>}, {transform_indices = @transform_1, window_bounds = array<i64: 8, 10>}, {transform_indices = @transform_2, window_bounds = array<i64: 8, 10>}]} {
    %c0 = arith.constant 0 : index
    %c0_0 = arith.constant 0 : index
    %0 = vector.load %arg1[%c0, %c0_0] : memref<8x10xf32, #tpu.memory_space<vmem>>, vector<8x10xf32>
    %c0_1 = arith.constant 0 : index
    %c0_2 = arith.constant 0 : index
    %1 = vector.load %arg2[%c0_1, %c0_2] : memref<8x10xf32, #tpu.memory_space<vmem>>, vector<8x10xf32>
    %cst = arith.constant dense<0xFF800000> : vector<8xf32>
    %2 = vector.multi_reduction <maximumf>, %0, %cst [1] : vector<8x10xf32> to vector<8xf32>
    %3 = vector.shape_cast %2 : vector<8xf32> to vector<8x1xf32>
    %4 = vector.broadcast %3 : vector<8x1xf32> to vector<8x10xf32>
    %5 = arith.subf %0, %4 : vector<8x10xf32>
    %6 = math.exp %5 : vector<8x10xf32>
    %cst_3 = arith.constant dense<0.000000e+00> : vector<8xf32>
    %7 = vector.multi_reduction <add>, %6, %cst_3 [1] : vector<8x10xf32> to vector<8xf32>
    %8 = vector.shape_cast %7 : vector<8xf32> to vector<8x1xf32>
    %9 = math.log %8 : vector<8x1xf32>
    %cst_4 = arith.constant dense<0xFF800000> : vector<8xf32>
    %10 = vector.multi_reduction <maximumf>, %1, %cst_4 [1] : vector<8x10xf32> to vector<8xf32>
    %11 = vector.shape_cast %10 : vector<8xf32> to vector<8x1xf32>
    %12 = vector.broadcast %11 : vector<8x1xf32> to vector<8x10xf32>
    %13 = arith.subf %1, %12 : vector<8x10xf32>
    %14 = math.exp %13 : vector<8x10xf32>
    %cst_5 = arith.constant dense<0.000000e+00> : vector<8xf32>
    %15 = vector.multi_reduction <add>, %14, %cst_5 [1] : vector<8x10xf32> to vector<8xf32>
    %16 = vector.shape_cast %15 : vector<8xf32> to vector<8x1xf32>
    %cst_6 = arith.constant 6.000000e+00 : f32
    %17 = vector.broadcast %cst_6 : f32 to vector<8x1xf32>
    %18 = arith.divf %17, %16 : vector<8x1xf32>
    %19 = arith.subf %13, %5 : vector<8x10xf32>
    %20 = math.log %16 : vector<8x1xf32>
    %21 = arith.subf %9, %20 : vector<8x1xf32>
    %22 = vector.broadcast %21 : vector<8x1xf32> to vector<8x10xf32>
    %23 = arith.addf %19, %22 : vector<8x10xf32>
    %24 = arith.mulf %14, %23 : vector<8x10xf32>
    %25 = vector.broadcast %18 : vector<8x1xf32> to vector<8x10xf32>
    %26 = arith.mulf %24, %25 : vector<8x10xf32>
    %c0_7 = arith.constant 0 : index
    %c0_8 = arith.constant 0 : index
    %27 = vector.load %arg3[%c0_7, %c0_8] : memref<8x10xf32, #tpu.memory_space<vmem>>, vector<8x10xf32>
    tpu.vector_store %arg3[%c0_7, %c0_8], %26 {strides = array<i32>} : memref<8x10xf32, #tpu.memory_space<vmem>>, vector<8x10xf32>,
    return
  }
  func.func @transform_0(%arg0: i32) -> (i32, i32) {
    %c0_i32 = arith.constant 0 : i32
    %c0_i32_0 = arith.constant 0 : i32
    return %arg0, %c0_i32 : i32, i32
  }
  func.func @transform_1(%arg0: i32) -> (i32, i32) {
    %c0_i32 = arith.constant 0 : i32
    %c0_i32_0 = arith.constant 0 : i32
    return %arg0, %c0_i32 : i32, i32
  }
  func.func @transform_2(%arg0: i32) -> (i32, i32) {
    %c0_i32 = arith.constant 0 : i32
    %c0_i32_0 = arith.constant 0 : i32
    return %arg0, %c0_i32 : i32, i32
  }
}

</mosaic_0001>

<llo_original>
// kernel: tpu_custom_call.1
$region0: #{tpu_custom_call.1}
  #allocation0 [shape = 'u32[]', space=smem, size = 0x4, offset = 0x4, fixed_abs, tag = 'smem constant byte address 0x4 - core index']
  #allocation1 [shape = 'u32[144,128]{1,0:T(1,128)}', space=vmem, size = 0x12000, scoped, tag = 'internal scratch']
  %s0 = inlined_call_operand.hbm [shape: f32[6,10], index: 0, kind: input, shape index: {}]
  %s1 = inlined_call_operand.hbm [shape: f32[6,10], index: 1, kind: input, shape index: {}]
  %s2 = inlined_call_operand.hbm [shape: f32[6,10], index: 2, kind: output, shape index: {}]
  %s3 = sld [smem:[#allocation0]]
  $region26: #{tpu_custom_call.1} parent=0
    _
  %s5 = ssub.s32 1, %s3
  %s6 = scalar_select 0, %s5, %s3
  $region1: #{tpu_custom_call.1} parent=0
    #allocation2 [shape = 'u8[4096]{0}', space=vmem, size = 0x1000, scoped, tag = 'input window, operand 0, single buffered']
    #allocation3 [shape = 's32[1]{0}', space=sflag, size = 0x4, scoped, tag = 'scoped memory for tpu_custom_call.1']
    #allocation4 [shape = 's32[1]{0}', space=sflag, size = 0x4, scoped, tag = 'scoped memory for tpu_custom_call.1']
    #allocation5 [shape = 'u8[4096]{0}', space=vmem, size = 0x1000, scoped, tag = 'input window, operand 1, single buffered']
    #allocation6 [shape = 's32[1]{0}', space=sflag, size = 0x4, scoped, tag = 'scoped memory for tpu_custom_call.1']
    #allocation7 [shape = 'u8[4096]{0}', space=vmem, size = 0x1000, scoped, tag = 'output window, operand 0, single buffered']
    %7 = vsyncpa [#allocation3], 0
    %8 = vsyncpa [#allocation6], 0
    %9 = vsyncpa [#allocation4], 0
    // Predicated region
    $region2: #{tpu_custom_call.1} parent=1 // pred_check
      _
    $region3: #{tpu_custom_call.1} parent=1 // pred_check_branch
      %11 = sbr.rel (0) target = $region5
    $region4: #{tpu_custom_call.1} parent=1 // pred_region
      %s13 = ssub.s32 128, 128
      %14 = vsyncadd [#allocation3], %s13
      %s16 = sshll.u32 [#allocation2], 4
      %s17 = int_to_ptr.vmem [resolvable:$true] %s16
      %19 = dma.hbm_to_vmem [thread:$0]  %s0, 128, %s17, [#allocation3]
    $region5: #{tpu_custom_call.1} parent=1 // pred_fallthru
      _
    // Predicated region
    $region6: #{tpu_custom_call.1} parent=1 // pred_check
      _
    $region7: #{tpu_custom_call.1} parent=1 // pred_check_branch
      %21 = sbr.rel (0) target = $region9
    $region8: #{tpu_custom_call.1} parent=1 // pred_region
      %s23 = ssub.s32 128, 128
      %24 = vsyncadd [#allocation6], %s23
      %s26 = sshll.u32 [#allocation5], 4
      %s27 = int_to_ptr.vmem [resolvable:$true] %s26
      %29 = dma.hbm_to_vmem [thread:$0]  %s1, 128, %s27, [#allocation6]
    $region9: #{tpu_custom_call.1} parent=1 // pred_fallthru
      _
    // Predicated region
    $region10: #{tpu_custom_call.1} parent=1 // pred_check
      _
    $region11: #{tpu_custom_call.1} parent=1 // pred_check_branch
      %31 = sbr.rel (0) target = $region13
    $region12: #{tpu_custom_call.1} parent=1 // pred_region
      %32 = dma.done [#allocation3], 128
    $region13: #{tpu_custom_call.1} parent=1 // pred_fallthru
      _
    // Predicated region
    $region14: #{tpu_custom_call.1} parent=1 // pred_check
      _
    $region15: #{tpu_custom_call.1} parent=1 // pred_check_branch
      %34 = sbr.rel (0) target = $region17
    $region16: #{tpu_custom_call.1} parent=1 // pred_region
      %35 = dma.done [#allocation6], 128
    $region17: #{tpu_custom_call.1} parent=1 // pred_fallthru
      _
    %v36 = vld [vmem:[#allocation2] sm:$0xff]
    %v37 = vld [vmem:[#allocation5] sm:$0xff]
    %vm38 = vcmask 80896
    %v39 = vsel %vm38, %v36, -inf
    %40 = vmax.xlane.f32.xlu0 %v39
    %v41 = vpop.xlane.xlu0 %40
    %v42 = vsub.f32 %v36, %v41
    %v43 = vmul.f32 %v42, 1.442695
    %v44 = vpow.pop %v43
    %v45 = vsel %vm38, %v44, 0.0
    %46 = vadd.xlane.f32.xlu0 %v45
    %v47 = vpop.xlane.xlu0 %46
    %v48 = vlog2.pop %v47
    %v49 = vmul.f32 %v48, 0.6931472
    %v50 = vsel %vm38, %v37, -inf
    %51 = vmax.xlane.f32.xlu0 %v50
    %v52 = vpop.xlane.xlu0 %51
    %v53 = vsub.f32 %v37, %v52
    %v54 = vmul.f32 %v53, 1.442695
    %v55 = vpow.pop %v54
    %v56 = vsel %vm38, %v55, 0.0
    %57 = vadd.xlane.f32.xlu0 %v56
    %v58 = vpop.xlane.xlu0 %57
    %v59 = vrcp.pop %v58
    %v60 = vmul.f32 6.0, %v59
    %v61 = vsub.f32 %v53, %v42
    %v62 = vlog2.pop %v58
    %v63 = vmul.f32 %v62, 0.6931472
    %v64 = vsub.f32 %v49, %v63
    %v65 = vadd.f32 %v61, %v64
    %v66 = vmul.f32 %v55, %v65
    %v67 = vmul.f32 %v66, %v60
    %68 = vst.msk [vmem:[#allocation7] sm:$0xff] %vm38, %v67
    // Predicated region
    $region18: #{tpu_custom_call.1} parent=1 // pred_check
      _
    $region19: #{tpu_custom_call.1} parent=1 // pred_check_branch
      %70 = sbr.rel (0) target = $region21
    $region20: #{tpu_custom_call.1} parent=1 // pred_region
      %s72 = ssub.s32 128, 128
      %73 = vsyncadd [#allocation4], %s72
      %s75 = sshll.u32 [#allocation7], 4
      %s76 = int_to_ptr.vmem [resolvable:$true] %s75
      %78 = dma.vmem_to_hbm [thread:$0]  %s76, 128, %s2, [#allocation4]
    $region21: #{tpu_custom_call.1} parent=1 // pred_fallthru
      _
    // Predicated region
    $region22: #{tpu_custom_call.1} parent=1 // pred_check
      _
    $region23: #{tpu_custom_call.1} parent=1 // pred_check_branch
      %80 = sbr.rel (0) target = $region25
    $region24: #{tpu_custom_call.1} parent=1 // pred_region
      %81 = dma.done [#allocation4], 128
    $region25: #{tpu_custom_call.1} parent=1 // pred_fallthru
      _
    %82 = vsyncpa [#allocation3], 1
    %83 = vsyncpa [#allocation6], 1
    %84 = vsyncpa [#allocation4], 1

</llo_original>
